<compile_context>
chip_gen: v6e
topology: v6e:2x2x1
jax: 0.10.0
libtpu: 0.0.40
codegen_flags: <defaults>
</compile_context>

<pallas_src>
import jax
import jax.numpy as jnp
from jax import lax
from jax.experimental import pallas as pl
from jax.experimental.pallas import tpu as pltpu

# Contract the last dim of both operands: (O, K) x (TILE_B, K) -> (O, TILE_B).
_TRANS_B_DIMS = (((1,), (1,)), ((), ()))


def _precision_booster_kernel(x_ref, w0_ref, b0_ref, w1_ref, b1_ref,
                              w2_ref, b2_ref, o_ref):
    x = x_ref[...]                                       # (TILE_B, D)

    # hidden0: Linear(D, 16), computed transposed -> (16, TILE_B).
    h0 = lax.dot_general(w0_ref[...], x, _TRANS_B_DIMS,
                         preferred_element_type=jnp.float32) + b0_ref[...]

    # hidden1: Linear(16, 16) + LeakyReLU(0.2) -> (16, TILE_B).
    h1 = jnp.dot(w1_ref[...], h0,
                 preferred_element_type=jnp.float32) + b1_ref[...]
    h1 = jnp.maximum(h1, 0.2 * h1)                       # LeakyReLU(0.2)

    # out: Linear(16, 1) + Sigmoid -> (1, TILE_B), lane-dense store.
    z = jnp.dot(w2_ref[...], h1,
                preferred_element_type=jnp.float32) + b2_ref[...]
    o_ref[...] = 0.5 * (1.0 + jnp.tanh(0.5 * z))         # sigmoid via EUP tanh


def _pick_tile_b(B, D, target_bytes=8 << 20):
    """Batch-tile rows so the lane-padded x tile is ~target_bytes."""
    d_pad = 128 * pl.cdiv(D, 128)            # VMEM lane padding of the x tile
    tile = (target_bytes // (4 * d_pad)) // 128 * 128
    tile = max(128, tile)
    tile = min(tile, 128 * pl.cdiv(B, 128))  # never bigger than (rounded) B
    # Prefer >= 4 grid steps (megacore sharding + prefetch/writeback overlap
    # on v7x) as long as tiles stay >= 2048 rows.
    if pl.cdiv(B, tile) < 4:
        alt = max(2048, 128 * pl.cdiv(pl.cdiv(B, 4), 128))
        tile = min(tile, alt)
    return tile


def precision_booster_forward(x, params, *, tile_b=None):
    """x: (B, inputDim) float32.  params: PyTorch-layout weights/biases.

    Returns (B, 1) float32, matching the torch module's forward."""
    B, D = x.shape
    w0, b0 = params["w0"], params["b0"]       # (16, D),  (16, 1)
    w1, b1 = params["w1"], params["b1"]       # (16, 16), (16, 1)
    w2, b2 = params["w2"], params["b2"]       # (1, 16),  (1, 1)

    if tile_b is None:
        tile_b = _pick_tile_b(B, D)
    else:
        tile_b = max(128, (int(tile_b) // 128) * 128)

    # Ragged last block is handled by Pallas (padded read / masked OOB store):
    # no host-side jnp.pad, no extra HBM pass over x.
    grid = (pl.cdiv(B, tile_b),)

    # Weights/biases: full-array blocks, constant index_map -> VMEM-resident.
    const = lambda a: pl.BlockSpec(a.shape, lambda i: (0, 0))

    out_t = pl.pallas_call(
        _precision_booster_kernel,
        out_shape=jax.ShapeDtypeStruct((1, B), jnp.float32),
        grid=grid,
        in_specs=[
            pl.BlockSpec((tile_b, D), lambda i: (i, 0)),  # x, streamed by tile
            const(w0), const(b0), const(w1), const(b1), const(w2), const(b2),
        ],
        out_specs=pl.BlockSpec((1, tile_b), lambda i: (0, i)),
        compiler_params=pltpu.CompilerParams(
            dimension_semantics=("parallel",),            # megacore on v7x
            vmem_limit_bytes=32 << 20),                   # safe on v5e/v6e/v7x
    )(x, w0, b0, w1, b1, w2, b2)

    # (1, B) -> (B, 1) to match the torch module's output; this is a real
    # lane->sublane relayout, skip it if the consumer can take (1, B).
    return out_t.reshape(B, 1)


def init_params(key, input_dim):
    """PyTorch nn.Linear default init (uniform +-1/sqrt(fan_in)).
    Weights stored in PyTorch (out, in) layout; biases as (out, 1) columns."""
    ks = jax.random.split(key, 6)

    def lin(kw, kb, fan_in, fan_out):
        bound = 1.0 / (fan_in ** 0.5)
        w = jax.random.uniform(kw, (fan_out, fan_in), jnp.float32, -bound, bound)
        b = jax.random.uniform(kb, (fan_out, 1), jnp.float32, -bound, bound)
        return w, b

    w0, b0 = lin(ks[0], ks[1], input_dim, 16)
    w1, b1 = lin(ks[2], ks[3], 16, 16)
    w2, b2 = lin(ks[4], ks[5], 16, 1)
    return {"w0": w0, "b0": b0, "w1": w1, "b1": b1, "w2": w2, "b2": b2}


def _reference_forward(x, p):
    hi = jax.lax.Precision.HIGHEST
    h0 = jnp.dot(x, p["w0"].T, precision=hi) + p["b0"].T
    h1 = jnp.dot(h0, p["w1"].T, precision=hi) + p["b1"].T
    h1 = jnp.where(h1 >= 0, h1, 0.2 * h1)
    z = jnp.dot(h1, p["w2"].T, precision=hi) + p["b2"].T
    return jax.nn.sigmoid(z)


if __name__ == "__main__":
    key = jax.random.PRNGKey(0)
    k_x, k_p = jax.random.split(key)

    # Small but non-trivial: B is not a multiple of 128.
    B, input_dim = 300, 32
    x = jax.random.normal(k_x, (B, input_dim), jnp.float32)
    params = init_params(k_p, input_dim)

    ref = _reference_forward(x, params)

    # 1) Auto-picked tile (single grid step at this small B).
    out = jax.block_until_ready(precision_booster_forward(x, params))
    assert out.shape == (B, 1), out.shape
    assert jnp.allclose(out, ref, atol=1e-4, rtol=1e-4), \
        float(jnp.max(jnp.abs(out - ref)))

    # 2) Small explicit tile: 3 grid steps with a ragged last block
    #    (300 = 2*128 + 44) to exercise the no-pad / masked-store path.
    out2 = jax.block_until_ready(precision_booster_forward(x, params, tile_b=128))
    assert out2.shape == (B, 1), out2.shape
    assert jnp.allclose(out2, ref, atol=1e-4, rtol=1e-4), \
        float(jnp.max(jnp.abs(out2 - ref)))

    print("KERNEL_OK")
</pallas_src>

<mosaic_0001>
module attributes {stable_mosaic.version = 11 : i64} {
  func.func @_precision_booster_kernel(%arg0: i32, %arg1: memref<384x32xf32, #tpu.memory_space<vmem>>, %arg2: memref<16x32xf32, #tpu.memory_space<vmem>>, %arg3: memref<16x1xf32, #tpu.memory_space<vmem>>, %arg4: memref<16x16xf32, #tpu.memory_space<vmem>>, %arg5: memref<16x1xf32, #tpu.memory_space<vmem>>, %arg6: memref<1x16xf32, #tpu.memory_space<vmem>>, %arg7: memref<1x1xf32, #tpu.memory_space<vmem>>, %arg8: memref<1x384xf32, #tpu.memory_space<vmem>>) attributes {dimension_semantics = [#tpu.dimension_semantics<parallel>], iteration_bounds = array<i64: 1>, scalar_prefetch = 0 : i64, scratch_operands = 0 : i64, tpu.core_type = #tpu.core_type<tc>, window_params = [{transform_indices = @transform_0, window_bounds = array<i64: 384, 32>}, {pipeline_mode = #tpu.pipeline_mode<synchronous>, transform_indices = @transform_1, window_bounds = array<i64: 16, 32>}, {pipeline_mode = #tpu.pipeline_mode<synchronous>, transform_indices = @transform_2, window_bounds = array<i64: 16, 1>}, {pipeline_mode = #tpu.pipeline_mode<synchronous>, transform_indices = @transform_3, window_bounds = array<i64: 16, 16>}, {pipeline_mode = #tpu.pipeline_mode<synchronous>, transform_indices = @transform_4, window_bounds = array<i64: 16, 1>}, {pipeline_mode = #tpu.pipeline_mode<synchronous>, transform_indices = @transform_5, window_bounds = array<i64: 1, 16>}, {pipeline_mode = #tpu.pipeline_mode<synchronous>, transform_indices = @transform_6, window_bounds = array<i64: 1, 1>}, {transform_indices = @transform_7, window_bounds = array<i64: 1, 384>}]} {
    %c0 = arith.constant 0 : index
    %c0_0 = arith.constant 0 : index
    %0 = vector.load %arg1[%c0, %c0_0] : memref<384x32xf32, #tpu.memory_space<vmem>>, vector<384x32xf32>
    %c0_1 = arith.constant 0 : index
    %c0_2 = arith.constant 0 : index
    %1 = vector.load %arg2[%c0_1, %c0_2] : memref<16x32xf32, #tpu.memory_space<vmem>>, vector<16x32xf32>
    %cst = arith.constant dense<0.000000e+00> : vector<16x384xf32>
    %2 = tpu.matmul %1, %0, %cst {dimension_numbers = #tpu.dot_dimension_numbers<[1], [1], [0], [0], [0, 0, 1, 0], [], []>} : vector<16x32xf32>, vector<384x32xf32>, vector<16x384xf32> -> vector<16x384xf32>
    %c0_3 = arith.constant 0 : index
    %c0_4 = arith.constant 0 : index
    %3 = vector.load %arg3[%c0_3, %c0_4] : memref<16x1xf32, #tpu.memory_space<vmem>>, vector<16x1xf32>
    %4 = vector.broadcast %3 : vector<16x1xf32> to vector<16x384xf32>
    %5 = arith.addf %2, %4 : vector<16x384xf32>
    %c0_5 = arith.constant 0 : index
    %c0_6 = arith.constant 0 : index
    %6 = vector.load %arg4[%c0_5, %c0_6] : memref<16x16xf32, #tpu.memory_space<vmem>>, vector<16x16xf32>
    %cst_7 = arith.constant dense<0.000000e+00> : vector<16x384xf32>
    %7 = tpu.matmul %6, %5, %cst_7 {dimension_numbers = #tpu.dot_dimension_numbers<[1], [0], [0], [1], [0, 0, 1, 1], [], []>} : vector<16x16xf32>, vector<16x384xf32>, vector<16x384xf32> -> vector<16x384xf32>
    %c0_8 = arith.constant 0 : index
    %c0_9 = arith.constant 0 : index
    %8 = vector.load %arg5[%c0_8, %c0_9] : memref<16x1xf32, #tpu.memory_space<vmem>>, vector<16x1xf32>
    %9 = vector.broadcast %8 : vector<16x1xf32> to vector<16x384xf32>
    %10 = arith.addf %7, %9 : vector<16x384xf32>
    %cst_10 = arith.constant 2.000000e-01 : f32
    %11 = vector.broadcast %cst_10 : f32 to vector<16x384xf32>
    %12 = arith.mulf %11, %10 : vector<16x384xf32>
    %13 = arith.maximumf %10, %12 : vector<16x384xf32>
    %c0_11 = arith.constant 0 : index
    %c0_12 = arith.constant 0 : index
    %14 = vector.load %arg6[%c0_11, %c0_12] : memref<1x16xf32, #tpu.memory_space<vmem>>, vector<1x16xf32>
    %cst_13 = arith.constant dense<0.000000e+00> : vector<1x384xf32>
    %15 = tpu.matmul %14, %13, %cst_13 {dimension_numbers = #tpu.dot_dimension_numbers<[1], [0], [0], [1], [0, 0, 1, 1], [], []>} : vector<1x16xf32>, vector<16x384xf32>, vector<1x384xf32> -> vector<1x384xf32>
    %c0_14 = arith.constant 0 : index
    %c0_15 = arith.constant 0 : index
    %16 = vector.load %arg7[%c0_14, %c0_15] : memref<1x1xf32, #tpu.memory_space<vmem>>, vector<1x1xf32>
    %17 = vector.broadcast %16 : vector<1x1xf32> to vector<1x384xf32>
    %18 = arith.addf %15, %17 : vector<1x384xf32>
    %cst_16 = arith.constant 5.000000e-01 : f32
    %19 = vector.broadcast %cst_16 : f32 to vector<1x384xf32>
    %20 = arith.mulf %19, %18 : vector<1x384xf32>
    %21 = math.tanh %20 : vector<1x384xf32>
    %cst_17 = arith.constant 1.000000e+00 : f32
    %22 = vector.broadcast %cst_17 : f32 to vector<1x384xf32>
    %23 = arith.addf %22, %21 : vector<1x384xf32>
    %cst_18 = arith.constant 5.000000e-01 : f32
    %24 = vector.broadcast %cst_18 : f32 to vector<1x384xf32>
    %25 = arith.mulf %24, %23 : vector<1x384xf32>
    %c0_19 = arith.constant 0 : index
    %c0_20 = arith.constant 0 : index
    %26 = vector.load %arg8[%c0_19, %c0_20] : memref<1x384xf32, #tpu.memory_space<vmem>>, vector<1x384xf32>
    tpu.vector_store %arg8[%c0_19, %c0_20], %25 {strides = array<i32>} : memref<1x384xf32, #tpu.memory_space<vmem>>, vector<1x384xf32>,
    return
  }
  func.func @transform_0(%arg0: i32) -> (i32, i32) {
    %c0_i32 = arith.constant 0 : i32
    %c0_i32_0 = arith.constant 0 : i32
    return %arg0, %c0_i32 : i32, i32
  }
  func.func @transform_1(%arg0: i32) -> (i32, i32) {
    %c0_i32 = arith.constant 0 : i32
    %c0_i32_0 = arith.constant 0 : i32
    %c0_i32_1 = arith.constant 0 : i32
    return %c0_i32, %c0_i32_0 : i32, i32
  }
  func.func @transform_2(%arg0: i32) -> (i32, i32) {
    %c0_i32 = arith.constant 0 : i32
    %c0_i32_0 = arith.constant 0 : i32
    %c0_i32_1 = arith.constant 0 : i32
    return %c0_i32, %c0_i32_0 : i32, i32
  }
  func.func @transform_3(%arg0: i32) -> (i32, i32) {
    %c0_i32 = arith.constant 0 : i32
    %c0_i32_0 = arith.constant 0 : i32
    %c0_i32_1 = arith.constant 0 : i32
    return %c0_i32, %c0_i32_0 : i32, i32
  }
  func.func @transform_4(%arg0: i32) -> (i32, i32) {
    %c0_i32 = arith.constant 0 : i32
    %c0_i32_0 = arith.constant 0 : i32
    %c0_i32_1 = arith.constant 0 : i32
    return %c0_i32, %c0_i32_0 : i32, i32
  }
  func.func @transform_5(%arg0: i32) -> (i32, i32) {
    %c0_i32 = arith.constant 0 : i32
    %c0_i32_0 = arith.constant 0 : i32
    %c0_i32_1 = arith.constant 0 : i32
    return %c0_i32, %c0_i32_0 : i32, i32
  }
  func.func @transform_6(%arg0: i32) -> (i32, i32) {
    %c0_i32 = arith.constant 0 : i32
    %c0_i32_0 = arith.constant 0 : i32
    %c0_i32_1 = arith.constant 0 : i32
    return %c0_i32, %c0_i32_0 : i32, i32
  }
  func.func @transform_7(%arg0: i32) -> (i32, i32) {
    %c0_i32 = arith.constant 0 : i32
    %c0_i32_0 = arith.constant 0 : i32
    return %c0_i32, %arg0 : i32, i32
  }
}

</mosaic_0001>

<llo_original>
// kernel: tpu_custom_call.1
$region0: #{tpu_custom_call.1}
  #allocation0 [shape = 'u32[]', space=smem, size = 0x4, offset = 0x4, fixed_abs, tag = 'smem constant byte address 0x4 - core index']
  #allocation1 [shape = 'u32[144,128]{1,0:T(1,128)}', space=vmem, size = 0x12000, scoped, tag = 'internal scratch']
  #allocation2 [shape = 'f32[1,1]{1,0:T(1,128)S(1)}', space=vmem, size = 0x200, scoped, tag = 'scoped memory for tpu_custom_call.1']
  %s0 = inlined_call_operand.vmem [shape: f32[300,32], index: 0, kind: input, shape index: {}]
  %s1 = inlined_call_operand.vmem [shape: f32[16,32], index: 1, kind: input, shape index: {}]
  %s2 = inlined_call_operand.vmem [shape: f32[16,1], index: 2, kind: input, shape index: {}]
  %s3 = inlined_call_operand.vmem [shape: f32[16,16], index: 3, kind: input, shape index: {}]
  %s4 = inlined_call_operand.vmem [shape: f32[16,1], index: 4, kind: input, shape index: {}]
  %s5 = inlined_call_operand.vmem [shape: f32[1,16], index: 5, kind: input, shape index: {}]
  %s6 = inlined_call_operand.<no memory space> [shape: f32[1,1], index: 6, kind: input, shape index: {}]
  %s7 = inlined_call_operand.hbm [shape: f32[1,300], index: 7, kind: output, shape index: {}]
  %s8 = sld [smem:[#allocation0]]
  $region38: #{tpu_custom_call.1} parent=0
    _
  %s10 = ssub.s32 1, %s8
  %s11 = scalar_select 0, %s10, %s8
  %v12 = vstv %s6
  %13 = vst [vmem:[#allocation2] sm:$0x1] %v12
  $region1: #{tpu_custom_call.1} parent=0
    #allocation3 [shape = 'u8[1536]{0}', space=vmem, size = 0x800, scoped, tag = 'output window, operand 0, single buffered']
    #allocation4 [shape = 's32[1]{0}', space=sflag, size = 0x4, scoped, tag = 'scoped memory for tpu_custom_call.1']
    %14 = vsyncpa [#allocation4], 0
    // Predicated region
    $region2: #{tpu_custom_call.1} parent=1 // pred_check
      _
    $region3: #{tpu_custom_call.1} parent=1 // pred_check_branch
      %16 = sbr.rel (0) target = $region5
    $region4: #{tpu_custom_call.1} parent=1 // pred_region
      _
    $region5: #{tpu_custom_call.1} parent=1 // pred_fallthru
      _
    // Predicated region
    $region6: #{tpu_custom_call.1} parent=1 // pred_check
      _
    $region7: #{tpu_custom_call.1} parent=1 // pred_check_branch
      %18 = sbr.rel (0) target = $region9
    $region8: #{tpu_custom_call.1} parent=1 // pred_region
      _
    $region9: #{tpu_custom_call.1} parent=1 // pred_fallthru
      _
    // Predicated region
    $region10: #{tpu_custom_call.1} parent=1 // pred_check
      _
    $region11: #{tpu_custom_call.1} parent=1 // pred_check_branch
      %20 = sbr.rel (0) target = $region13
    $region12: #{tpu_custom_call.1} parent=1 // pred_region
      _
    $region13: #{tpu_custom_call.1} parent=1 // pred_fallthru
      _
    // Predicated region
    $region14: #{tpu_custom_call.1} parent=1 // pred_check
      _
    $region15: #{tpu_custom_call.1} parent=1 // pred_check_branch
      %22 = sbr.rel (0) target = $region17
    $region16: #{tpu_custom_call.1} parent=1 // pred_region
      _
    $region17: #{tpu_custom_call.1} parent=1 // pred_fallthru
      _
    // Predicated region
    $region18: #{tpu_custom_call.1} parent=1 // pred_check
      _
    $region19: #{tpu_custom_call.1} parent=1 // pred_check_branch
      %24 = sbr.rel (0) target = $region21
    $region20: #{tpu_custom_call.1} parent=1 // pred_region
      _
    $region21: #{tpu_custom_call.1} parent=1 // pred_fallthru
      _
    // Predicated region
    $region22: #{tpu_custom_call.1} parent=1 // pred_check
      _
    $region23: #{tpu_custom_call.1} parent=1 // pred_check_branch
      %26 = sbr.rel (0) target = $region25
    $region24: #{tpu_custom_call.1} parent=1 // pred_region
      _
    $region25: #{tpu_custom_call.1} parent=1 // pred_fallthru
      _
    // Predicated region
    $region26: #{tpu_custom_call.1} parent=1 // pred_check
      _
    $region27: #{tpu_custom_call.1} parent=1 // pred_check_branch
      %28 = sbr.rel (0) target = $region29
    $region28: #{tpu_custom_call.1} parent=1 // pred_region
      _
    $region29: #{tpu_custom_call.1} parent=1 // pred_fallthru
      _
    %v29 = vld [vmem:[%s0] sm:$0xff]
    %v30 = vld [vmem:[%s0 + $0x8] sm:$0xff]
    %v31 = vld [vmem:[%s0 + $0x10] sm:$0xff]
    %v32 = vld [vmem:[%s0 + $0x18] sm:$0xff]
    %v33 = vld [vmem:[%s0 + $0x20] sm:$0xff]
    %v34 = vld [vmem:[%s0 + $0x28] sm:$0xff]
    %v35 = vld [vmem:[%s0 + $0x30] sm:$0xff]
    %v36 = vld [vmem:[%s0 + $0x38] sm:$0xff]
    %v37 = vld [vmem:[%s0 + $0x40] sm:$0xff]
    %v38 = vld [vmem:[%s0 + $0x48] sm:$0xff]
    %v39 = vld [vmem:[%s0 + $0x50] sm:$0xff]
    %v40 = vld [vmem:[%s0 + $0x58] sm:$0xff]
    %v41 = vld [vmem:[%s0 + $0x60] sm:$0xff]
    %v42 = vld [vmem:[%s0 + $0x68] sm:$0xff]
    %v43 = vld [vmem:[%s0 + $0x70] sm:$0xff]
    %v44 = vld [vmem:[%s0 + $0x78] sm:$0xff]
    %v45 = vld [vmem:[%s0 + $0x80] sm:$0xff]
    %v46 = vld [vmem:[%s0 + $0x88] sm:$0xff]
    %v47 = vld [vmem:[%s0 + $0x90] sm:$0xff]
    %v48 = vld [vmem:[%s0 + $0x98] sm:$0xff]
    %v49 = vld [vmem:[%s0 + $0xa0] sm:$0xff]
    %v50 = vld [vmem:[%s0 + $0xa8] sm:$0xff]
    %v51 = vld [vmem:[%s0 + $0xb0] sm:$0xff]
    %v52 = vld [vmem:[%s0 + $0xb8] sm:$0xff]
    %v53 = vld [vmem:[%s0 + $0xc0] sm:$0xff]
    %v54 = vld [vmem:[%s0 + $0xc8] sm:$0xff]
    %v55 = vld [vmem:[%s0 + $0xd0] sm:$0xff]
    %v56 = vld [vmem:[%s0 + $0xd8] sm:$0xff]
    %v57 = vld [vmem:[%s0 + $0xe0] sm:$0xff]
    %v58 = vld [vmem:[%s0 + $0xe8] sm:$0xff]
    %v59 = vld [vmem:[%s0 + $0xf0] sm:$0xff]
    %v60 = vld [vmem:[%s0 + $0xf8] sm:$0xff]
    %v61 = vld [vmem:[%s0 + $0x100] sm:$0xff]
    %v62 = vld [vmem:[%s0 + $0x108] sm:$0xff]
    %v63 = vld [vmem:[%s0 + $0x110] sm:$0xff]
    %v64 = vld [vmem:[%s0 + $0x118] sm:$0xff]
    %v65 = vld [vmem:[%s0 + $0x120] sm:$0xff]
    %v66 = vld [vmem:[%s0 + $0x128] sm:$0xff]
    %v67 = vld [vmem:[%s0 + $0x130] sm:$0xff]
    %v68 = vld [vmem:[%s0 + $0x138] sm:$0xff]
    %v69 = vld [vmem:[%s0 + $0x140] sm:$0xff]
    %v70 = vld [vmem:[%s0 + $0x148] sm:$0xff]
    %v71 = vld [vmem:[%s0 + $0x150] sm:$0xff]
    %v72 = vld [vmem:[%s0 + $0x158] sm:$0xff]
    %v73 = vld [vmem:[%s0 + $0x160] sm:$0xff]
    %v74 = vld [vmem:[%s0 + $0x168] sm:$0xff]
    %v75 = vld [vmem:[%s0 + $0x170] sm:$0xff]
    %v76 = vld [vmem:[%s0 + $0x178] sm:$0xff]
    %v77 = vld [vmem:[%s1] sm:$0xff]
    %v78 = vld [vmem:[%s1 + $0x8] sm:$0xff]
    %v79 = vld [vmem:[%s2] sm:$0xff]
    %v80 = vld [vmem:[%s2 + $0x8] sm:$0xff]
    %82 = vset.pattern.permute.xlu0 0
    %83 = vperm.xlu0 %82, %v79
    %v84 = vpop.permute.xlu0 %83
    %87 = vset.pattern.permute.xlu0 0
    %88 = vperm.xlu0 %87, %v80
    %v89 = vpop.permute.xlu0 %88
    %vm91 = vcmask 261120
    %v93 = vsel %vm91, %v77, 0
    %v96 = vsel %vm91, %v78, 0
    %v99 = vsel %vm91, %v29, 0
    %v102 = vsel %vm91, %v30, 0
    %v105 = vsel %vm91, %v31, 0
    %v108 = vsel %vm91, %v32, 0
    %v111 = vsel %vm91, %v33, 0
    %v114 = vsel %vm91, %v34, 0
    %v117 = vsel %vm91, %v35, 0
    %v120 = vsel %vm91, %v36, 0
    %v123 = vsel %vm91, %v37, 0
    %v126 = vsel %vm91, %v38, 0
    %v129 = vsel %vm91, %v39, 0
    %v132 = vsel %vm91, %v40, 0
    %v135 = vsel %vm91, %v41, 0
    %v138 = vsel %vm91, %v42, 0
    %v141 = vsel %vm91, %v43, 0
    %v144 = vsel %vm91, %v44, 0
    %v147 = vsel %vm91, %v45, 0
    %v150 = vsel %vm91, %v46, 0
    %v153 = vsel %vm91, %v47, 0
    %v156 = vsel %vm91, %v48, 0
    %v159 = vsel %vm91, %v49, 0
    %v162 = vsel %vm91, %v50, 0
    %v165 = vsel %vm91, %v51, 0
    %v168 = vsel %vm91, %v52, 0
    %v171 = vsel %vm91, %v53, 0
    %v174 = vsel %vm91, %v54, 0
    %v177 = vsel %vm91, %v55, 0
    %v180 = vsel %vm91, %v56, 0
    %v183 = vsel %vm91, %v57, 0
    %v186 = vsel %vm91, %v58, 0
    %v189 = vsel %vm91, %v59, 0
    %v192 = vsel %vm91, %v60, 0
    %v195 = vsel %vm91, %v61, 0
    %v198 = vsel %vm91, %v62, 0
    %v201 = vsel %vm91, %v63, 0
    %v204 = vsel %vm91, %v64, 0
    %v207 = vsel %vm91, %v65, 0
    %v210 = vsel %vm91, %v66, 0
    %v213 = vsel %vm91, %v67, 0
    %v216 = vsel %vm91, %v68, 0
    %v219 = vsel %vm91, %v69, 0
    %v222 = vsel %vm91, %v70, 0
    %v225 = vsel %vm91, %v71, 0
    %v228 = vsel %vm91, %v72, 0
    %v231 = vsel %vm91, %v73, 0
    %v234 = vsel %vm91, %v74, 0
    %v237 = vsel %vm91, %v75, 0
    %v240 = vsel %vm91, %v76, 0
    %242 = vmatprep.subr.mxu0 0.0
    %243 = vmatpush1.xpose.msra.mxu0 %v144
    %244 = vmatprep.subr.mxu0 0.0
    %245 = vmatpush1.xpose.msra.mxu0 %v141
    %246 = vmatprep.subr.mxu0 0.0
    %247 = vmatpush1.xpose.msra.mxu0 %v138
    %248 = vmatprep.subr.mxu0 0.0
    %249 = vmatpush1.xpose.msra.mxu0 %v135
    %250 = vmatprep.subr.mxu0 0.0
    %251 = vmatpush1.xpose.msra.mxu0 %v132
    %252 = vmatprep.subr.mxu0 0.0
    %253 = vmatpush1.xpose.msra.mxu0 %v129
    %254 = vmatprep.subr.mxu0 0.0
    %255 = vmatpush1.xpose.msra.mxu0 %v126
    %256 = vmatprep.subr.mxu0 0.0
    %257 = vmatpush1.xpose.msra.mxu0 %v123
    %258 = vmatprep.subr.mxu0 0.0
    %259 = vmatpush1.xpose.msra.mxu0 %v120
    %260 = vmatprep.subr.mxu0 0.0
    %261 = vmatpush1.xpose.msra.mxu0 %v117
    %262 = vmatprep.subr.mxu0 0.0
    %263 = vmatpush1.xpose.msra.mxu0 %v114
    %264 = vmatprep.subr.mxu0 0.0
    %265 = vmatpush1.xpose.msra.mxu0 %v111
    %266 = vmatprep.subr.mxu0 0.0
    %267 = vmatpush1.xpose.msra.mxu0 %v108
    %268 = vmatprep.subr.mxu0 0.0
    %269 = vmatpush1.xpose.msra.mxu0 %v105
    %270 = vmatprep.subr.mxu0 0.0
    %271 = vmatpush1.xpose.msra.mxu0 %v102
    %272 = vmatprep.subr.mxu0 0.0
    %273 = vmatpush1.xpose.msra.mxu0 %v99
    %274 = vmatprep.subr.mxu0 0.0
    %275 = vmatpush2.xpose.msra.mxu0 %v192
    %276 = vmatprep.subr.mxu0 0.0
    %277 = vmatpush2.xpose.msra.mxu0 %v189
    %278 = vmatprep.subr.mxu0 0.0
    %279 = vmatpush2.xpose.msra.mxu0 %v186
    %280 = vmatprep.subr.mxu0 0.0
    %281 = vmatpush2.xpose.msra.mxu0 %v183
    %282 = vmatprep.subr.mxu0 0.0
    %283 = vmatpush2.xpose.msra.mxu0 %v180
    %284 = vmatprep.subr.mxu0 0.0
    %285 = vmatpush2.xpose.msra.mxu0 %v177
    %286 = vmatprep.subr.mxu0 0.0
    %287 = vmatpush2.xpose.msra.mxu0 %v174
    %288 = vmatprep.subr.mxu0 0.0
    %289 = vmatpush2.xpose.msra.mxu0 %v171
    %290 = vmatprep.subr.mxu0 0.0
    %291 = vmatpush2.xpose.msra.mxu0 %v168
    %292 = vmatprep.subr.mxu0 0.0
    %293 = vmatpush2.xpose.msra.mxu0 %v165
    %294 = vmatprep.subr.mxu0 0.0
    %295 = vmatpush2.xpose.msra.mxu0 %v162
    %296 = vmatprep.subr.mxu0 0.0
    %297 = vmatpush2.xpose.msra.mxu0 %v159
    %298 = vmatprep.subr.mxu0 0.0
    %299 = vmatpush2.xpose.msra.mxu0 %v156
    %300 = vmatprep.subr.mxu0 0.0
    %301 = vmatpush2.xpose.msra.mxu0 %v153
    %302 = vmatprep.subr.mxu0 0.0
    %303 = vmatpush2.xpose.msra.mxu0 %v150
    %304 = vmatprep.subr.mxu0 0.0
    %305 = vmatpush2.xpose.msra.mxu0 %v147
    %306 = vmatprep.mubr.f32.mxu0 0.0
    %307 = vmatmul.mubr.f32.gmra.mxu0 %v93
    %v308 = vpop.f32.mrf.mxu0
    %v309 = vadd.f32 %v84, %v308
    %v310 = vpop.f32.mrf.mxu0
    %v311 = vadd.f32 %v84, %v310
    %312 = vmatprep.mubr.f32.mxu0 0.0
    %313 = vmatmul.mubr.f32.gmra.mxu0 %v96
    %v314 = vpop.f32.mrf.mxu0
    %v315 = vadd.f32 %v89, %v314
    %v316 = vpop.f32.mrf.mxu0
    %v317 = vadd.f32 %v89, %v316
    %318 = vdwg.mxu0
    %319 = vmatprep.subr.mxu0 0.0
    %320 = vmatpush1.xpose.msra.mxu0 %v240
    %321 = vmatprep.subr.mxu0 0.0
    %322 = vmatpush1.xpose.msra.mxu0 %v237
    %323 = vmatprep.subr.mxu0 0.0
    %324 = vmatpush1.xpose.msra.mxu0 %v234
    %325 = vmatprep.subr.mxu0 0.0
    %326 = vmatpush1.xpose.msra.mxu0 %v231
    %327 = vmatprep.subr.mxu0 0.0
    %328 = vmatpush1.xpose.msra.mxu0 %v228
    %329 = vmatprep.subr.mxu0 0.0
    %330 = vmatpush1.xpose.msra.mxu0 %v225
    %331 = vmatprep.subr.mxu0 0.0
    %332 = vmatpush1.xpose.msra.mxu0 %v222
    %333 = vmatprep.subr.mxu0 0.0
    %334 = vmatpush1.xpose.msra.mxu0 %v219
    %335 = vmatprep.subr.mxu0 0.0
    %336 = vmatpush1.xpose.msra.mxu0 %v216
    %337 = vmatprep.subr.mxu0 0.0
    %338 = vmatpush1.xpose.msra.mxu0 %v213
    %339 = vmatprep.subr.mxu0 0.0
    %340 = vmatpush1.xpose.msra.mxu0 %v210
    %341 = vmatprep.subr.mxu0 0.0
    %342 = vmatpush1.xpose.msra.mxu0 %v207
    %343 = vmatprep.subr.mxu0 0.0
    %344 = vmatpush1.xpose.msra.mxu0 %v204
    %345 = vmatprep.subr.mxu0 0.0
    %346 = vmatpush1.xpose.msra.mxu0 %v201
    %347 = vmatprep.subr.mxu0 0.0
    %348 = vmatpush1.xpose.msra.mxu0 %v198
    %349 = vmatprep.subr.mxu0 0.0
    %350 = vmatpush1.xpose.msra.mxu0 %v195
    %351 = vmatprep.subr.mxu0 0.0
    %352 = vmatpush2.xpose.msra.mxu0 0.0
    %353 = vmatprep.subr.mxu0 0.0
    %354 = vmatpush2.xpose.msra.mxu0 0.0
    %355 = vmatprep.subr.mxu0 0.0
    %356 = vmatpush2.xpose.msra.mxu0 0.0
    %357 = vmatprep.subr.mxu0 0.0
    %358 = vmatpush2.xpose.msra.mxu0 0.0
    %359 = vmatprep.subr.mxu0 0.0
    %360 = vmatpush2.xpose.msra.mxu0 0.0
    %361 = vmatprep.subr.mxu0 0.0
    %362 = vmatpush2.xpose.msra.mxu0 0.0
    %363 = vmatprep.subr.mxu0 0.0
    %364 = vmatpush2.xpose.msra.mxu0 0.0
    %365 = vmatprep.subr.mxu0 0.0
    %366 = vmatpush2.xpose.msra.mxu0 0.0
    %367 = vmatprep.subr.mxu0 0.0
    %368 = vmatpush2.xpose.msra.mxu0 0.0
    %369 = vmatprep.subr.mxu0 0.0
    %370 = vmatpush2.xpose.msra.mxu0 0.0
    %371 = vmatprep.subr.mxu0 0.0
    %372 = vmatpush2.xpose.msra.mxu0 0.0
    %373 = vmatprep.subr.mxu0 0.0
    %374 = vmatpush2.xpose.msra.mxu0 0.0
    %375 = vmatprep.subr.mxu0 0.0
    %376 = vmatpush2.xpose.msra.mxu0 0.0
    %377 = vmatprep.subr.mxu0 0.0
    %378 = vmatpush2.xpose.msra.mxu0 0.0
    %379 = vmatprep.subr.mxu0 0.0
    %380 = vmatpush2.xpose.msra.mxu0 0.0
    %381 = vmatprep.subr.mxu0 0.0
    %382 = vmatpush2.xpose.msra.mxu0 0.0
    %383 = vmatprep.mubr.f32.mxu0 0.0
    %384 = vmatmul.mubr.f32.gmra.mxu0 %v93
    %v385 = vpop.f32.mrf.mxu0
    %v386 = vadd.f32 %v84, %v385
    %v387 = vpop.f32.mrf.mxu0
    %388 = vmatprep.mubr.f32.mxu0 0.0
    %389 = vmatmul.mubr.f32.gmra.mxu0 %v96
    %v390 = vpop.f32.mrf.mxu0
    %v391 = vadd.f32 %v89, %v390
    %v392 = vpop.f32.mrf.mxu0
    %393 = vdwg.mxu0
    %v394 = vld [vmem:[%s3] sm:$0xff]
    %v395 = vld [vmem:[%s3 + $0x8] sm:$0xff]
    %v396 = vld [vmem:[%s4] sm:$0xff]
    %v397 = vld [vmem:[%s4 + $0x8] sm:$0xff]
    %399 = vset.pattern.permute.xlu0 0
    %400 = vperm.xlu0 %399, %v396
    %v401 = vpop.permute.xlu0 %400
    %404 = vset.pattern.permute.xlu0 0
    %405 = vperm.xlu0 %404, %v397
    %v406 = vpop.permute.xlu0 %405
    %vm408 = vcmask 130048
    %v410 = vsel %vm408, %v394, 0
    %v413 = vsel %vm408, %v395, 0
    %415 = vmatprep.subr.mxu0 0.0
    %416 = vmatpush1.msra.mxu0 0.0
    %417 = vmatprep.subr.mxu0 0.0
    %418 = vmatpush1.msra.mxu0 0.0
    %419 = vmatprep.subr.mxu0 0.0
    %420 = vmatpush1.msra.mxu0 0.0
    %421 = vmatprep.subr.mxu0 0.0
    %422 = vmatpush1.msra.mxu0 0.0
    %423 = vmatprep.subr.mxu0 0.0
    %424 = vmatpush1.msra.mxu0 0.0
    %425 = vmatprep.subr.mxu0 0.0
    %426 = vmatpush1.msra.mxu0 0.0
    %427 = vmatprep.subr.mxu0 0.0
    %428 = vmatpush1.msra.mxu0 0.0
    %429 = vmatprep.subr.mxu0 0.0
    %430 = vmatpush1.msra.mxu0 0.0
    %431 = vmatprep.subr.mxu0 0.0
    %432 = vmatpush1.msra.mxu0 0.0
    %433 = vmatprep.subr.mxu0 0.0
    %434 = vmatpush1.msra.mxu0 0.0
    %435 = vmatprep.subr.mxu0 0.0
    %436 = vmatpush1.msra.mxu0 0.0
    %437 = vmatprep.subr.mxu0 0.0
    %438 = vmatpush1.msra.mxu0 0.0
    %439 = vmatprep.subr.mxu0 0.0
    %440 = vmatpush1.msra.mxu0 0.0
    %441 = vmatprep.subr.mxu0 0.0
    %442 = vmatpush1.msra.mxu0 0.0
    %443 = vmatprep.subr.mxu0 %v317
    %444 = vmatpush1.msra.mxu0 %v315
    %445 = vmatprep.subr.mxu0 %v311
    %446 = vmatpush1.msra.mxu0 %v309
    %447 = vmatprep.subr.mxu0 0.0
    %448 = vmatpush2.msra.mxu0 0.0
    %449 = vmatprep.subr.mxu0 0.0
    %450 = vmatpush2.msra.mxu0 0.0
    %451 = vmatprep.subr.mxu0 0.0
    %452 = vmatpush2.msra.mxu0 0.0
    %453 = vmatprep.subr.mxu0 0.0
    %454 = vmatpush2.msra.mxu0 0.0
    %455 = vmatprep.subr.mxu0 0.0
    %456 = vmatpush2.msra.mxu0 0.0
    %457 = vmatprep.subr.mxu0 0.0
    %458 = vmatpush2.msra.mxu0 0.0
    %459 = vmatprep.subr.mxu0 0.0
    %460 = vmatpush2.msra.mxu0 0.0
    %461 = vmatprep.subr.mxu0 0.0
    %462 = vmatpush2.msra.mxu0 0.0
    %463 = vmatprep.subr.mxu0 0.0
    %464 = vmatpush2.msra.mxu0 0.0
    %465 = vmatprep.subr.mxu0 0.0
    %466 = vmatpush2.msra.mxu0 0.0
    %467 = vmatprep.subr.mxu0 0.0
    %468 = vmatpush2.msra.mxu0 0.0
    %469 = vmatprep.subr.mxu0 0.0
    %470 = vmatpush2.msra.mxu0 0.0
    %471 = vmatprep.subr.mxu0 0.0
    %472 = vmatpush2.msra.mxu0 0.0
    %473 = vmatprep.subr.mxu0 0.0
    %474 = vmatpush2.msra.mxu0 0.0
    %475 = vmatprep.subr.mxu0 0.0
    %476 = vmatpush2.msra.mxu0 0.0
    %477 = vmatprep.subr.mxu0 0.0
    %478 = vmatpush2.msra.mxu0 0.0
    %479 = vmatprep.mubr.f32.mxu0 0.0
    %480 = vmatmul.mubr.f32.gmra.mxu0 %v410
    %v481 = vpop.f32.mrf.mxu0
    %v482 = vadd.f32 %v401, %v481
    %v483 = vpop.f32.mrf.mxu0
    %v484 = vadd.f32 %v401, %v483
    %485 = vmatprep.mubr.f32.mxu0 0.0
    %486 = vmatmul.mubr.f32.gmra.mxu0 %v413
    %v487 = vpop.f32.mrf.mxu0
    %v488 = vadd.f32 %v406, %v487
    %v489 = vpop.f32.mrf.mxu0
    %v490 = vadd.f32 %v406, %v489
    %491 = vdwg.mxu0
    %492 = vmatprep.subr.mxu0 0.0
    %493 = vmatpush1.msra.mxu0 0.0
    %494 = vmatprep.subr.mxu0 0.0
    %495 = vmatpush1.msra.mxu0 0.0
    %496 = vmatprep.subr.mxu0 0.0
    %497 = vmatpush1.msra.mxu0 0.0
    %498 = vmatprep.subr.mxu0 0.0
    %499 = vmatpush1.msra.mxu0 0.0
    %500 = vmatprep.subr.mxu0 0.0
    %501 = vmatpush1.msra.mxu0 0.0
    %502 = vmatprep.subr.mxu0 0.0
    %503 = vmatpush1.msra.mxu0 0.0
    %504 = vmatprep.subr.mxu0 0.0
    %505 = vmatpush1.msra.mxu0 0.0
    %506 = vmatprep.subr.mxu0 0.0
    %507 = vmatpush1.msra.mxu0 0.0
    %508 = vmatprep.subr.mxu0 0.0
    %509 = vmatpush1.msra.mxu0 0.0
    %510 = vmatprep.subr.mxu0 0.0
    %511 = vmatpush1.msra.mxu0 0.0
    %512 = vmatprep.subr.mxu0 0.0
    %513 = vmatpush1.msra.mxu0 0.0
    %514 = vmatprep.subr.mxu0 0.0
    %515 = vmatpush1.msra.mxu0 0.0
    %516 = vmatprep.subr.mxu0 0.0
    %517 = vmatpush1.msra.mxu0 0.0
    %518 = vmatprep.subr.mxu0 0.0
    %519 = vmatpush1.msra.mxu0 0.0
    %520 = vmatprep.subr.mxu0 0.0
    %521 = vmatpush1.msra.mxu0 %v391
    %522 = vmatprep.subr.mxu0 0.0
    %523 = vmatpush1.msra.mxu0 %v386
    %524 = vmatprep.subr.mxu0 0.0
    %525 = vmatpush2.msra.mxu0 0.0
    %526 = vmatprep.subr.mxu0 0.0
    %527 = vmatpush2.msra.mxu0 0.0
    %528 = vmatprep.subr.mxu0 0.0
    %529 = vmatpush2.msra.mxu0 0.0
    %530 = vmatprep.subr.mxu0 0.0
    %531 = vmatpush2.msra.mxu0 0.0
    %532 = vmatprep.subr.mxu0 0.0
    %533 = vmatpush2.msra.mxu0 0.0
    %534 = vmatprep.subr.mxu0 0.0
    %535 = vmatpush2.msra.mxu0 0.0
    %536 = vmatprep.subr.mxu0 0.0
    %537 = vmatpush2.msra.mxu0 0.0
    %538 = vmatprep.subr.mxu0 0.0
    %539 = vmatpush2.msra.mxu0 0.0
    %540 = vmatprep.subr.mxu0 0.0
    %541 = vmatpush2.msra.mxu0 0.0
    %542 = vmatprep.subr.mxu0 0.0
    %543 = vmatpush2.msra.mxu0 0.0
    %544 = vmatprep.subr.mxu0 0.0
    %545 = vmatpush2.msra.mxu0 0.0
    %546 = vmatprep.subr.mxu0 0.0
    %547 = vmatpush2.msra.mxu0 0.0
    %548 = vmatprep.subr.mxu0 0.0
    %549 = vmatpush2.msra.mxu0 0.0
    %550 = vmatprep.subr.mxu0 0.0
    %551 = vmatpush2.msra.mxu0 0.0
    %552 = vmatprep.subr.mxu0 0.0
    %553 = vmatpush2.msra.mxu0 0.0
    %554 = vmatprep.subr.mxu0 0.0
    %555 = vmatpush2.msra.mxu0 0.0
    %556 = vmatprep.mubr.f32.mxu0 0.0
    %557 = vmatmul.mubr.f32.gmra.mxu0 %v410
    %v558 = vpop.f32.mrf.mxu0
    %v559 = vadd.f32 %v401, %v558
    %v560 = vpop.f32.mrf.mxu0
    %561 = vmatprep.mubr.f32.mxu0 0.0
    %562 = vmatmul.mubr.f32.gmra.mxu0 %v413
    %v563 = vpop.f32.mrf.mxu0
    %v564 = vadd.f32 %v406, %v563
    %v565 = vpop.f32.mrf.mxu0
    %566 = vdwg.mxu0
    %v567 = vmul.f32 %v482, 0.2
    %v568 = vmul.f32 %v484, 0.2
    %v569 = vmul.f32 %v559, 0.2
    %v570 = vmul.f32 %v488, 0.2
    %v571 = vmul.f32 %v490, 0.2
    %v572 = vmul.f32 %v564, 0.2
    %v573 = vmax.f32 %v482, %v567
    %v574 = vmax.f32 %v484, %v568
    %v575 = vmax.f32 %v559, %v569
    %v576 = vmax.f32 %v488, %v570
    %v577 = vmax.f32 %v490, %v571
    %v578 = vmax.f32 %v564, %v572
    %v579 = vld [vmem:[%s5] sm:$0x1]
    %v580 = vld [vmem:[#allocation2] sm:$0x1]
    %582 = vset.pattern.permute.xlu0 0
    %583 = vperm.xlu0 %582, %v580
    %v584 = vpop.permute.xlu0 %583
    %v586 = vlaneseq
    %v587 = vshrl.u32 %v586, 7
    %v588 = vsub.s32 0, %v587
    %v589 = vrot.slane %v584, %v588
    %v591 = vsel %vm408, %v579, 0
    %593 = vmatprep.subr.mxu0 0.0
    %594 = vmatpush1.msra.mxu0 0.0
    %595 = vmatprep.subr.mxu0 0.0
    %596 = vmatpush1.msra.mxu0 0.0
    %597 = vmatprep.subr.mxu0 0.0
    %598 = vmatpush1.msra.mxu0 0.0
    %599 = vmatprep.subr.mxu0 0.0
    %600 = vmatpush1.msra.mxu0 0.0
    %601 = vmatprep.subr.mxu0 0.0
    %602 = vmatpush1.msra.mxu0 0.0
    %603 = vmatprep.subr.mxu0 0.0
    %604 = vmatpush1.msra.mxu0 0.0
    %605 = vmatprep.subr.mxu0 0.0
    %606 = vmatpush1.msra.mxu0 0.0
    %607 = vmatprep.subr.mxu0 0.0
    %608 = vmatpush1.msra.mxu0 0.0
    %609 = vmatprep.subr.mxu0 0.0
    %610 = vmatpush1.msra.mxu0 0.0
    %611 = vmatprep.subr.mxu0 0.0
    %612 = vmatpush1.msra.mxu0 0.0
    %613 = vmatprep.subr.mxu0 0.0
    %614 = vmatpush1.msra.mxu0 0.0
    %615 = vmatprep.subr.mxu0 0.0
    %616 = vmatpush1.msra.mxu0 0.0
    %617 = vmatprep.subr.mxu0 0.0
    %618 = vmatpush1.msra.mxu0 0.0
    %619 = vmatprep.subr.mxu0 0.0
    %620 = vmatpush1.msra.mxu0 0.0
    %621 = vmatprep.subr.mxu0 %v577
    %622 = vmatpush1.msra.mxu0 %v576
    %623 = vmatprep.subr.mxu0 %v574
    %624 = vmatpush1.msra.mxu0 %v573
    %625 = vmatprep.subr.mxu0 0.0
    %626 = vmatpush2.msra.mxu0 0.0
    %627 = vmatprep.subr.mxu0 0.0
    %628 = vmatpush2.msra.mxu0 0.0
    %629 = vmatprep.subr.mxu0 0.0
    %630 = vmatpush2.msra.mxu0 0.0
    %631 = vmatprep.subr.mxu0 0.0
    %632 = vmatpush2.msra.mxu0 0.0
    %633 = vmatprep.subr.mxu0 0.0
    %634 = vmatpush2.msra.mxu0 0.0
    %635 = vmatprep.subr.mxu0 0.0
    %636 = vmatpush2.msra.mxu0 0.0
    %637 = vmatprep.subr.mxu0 0.0
    %638 = vmatpush2.msra.mxu0 0.0
    %639 = vmatprep.subr.mxu0 0.0
    %640 = vmatpush2.msra.mxu0 0.0
    %641 = vmatprep.subr.mxu0 0.0
    %642 = vmatpush2.msra.mxu0 0.0
    %643 = vmatprep.subr.mxu0 0.0
    %644 = vmatpush2.msra.mxu0 0.0
    %645 = vmatprep.subr.mxu0 0.0
    %646 = vmatpush2.msra.mxu0 0.0
    %647 = vmatprep.subr.mxu0 0.0
    %648 = vmatpush2.msra.mxu0 0.0
    %649 = vmatprep.subr.mxu0 0.0
    %650 = vmatpush2.msra.mxu0 0.0
    %651 = vmatprep.subr.mxu0 0.0
    %652 = vmatpush2.msra.mxu0 0.0
    %653 = vmatprep.subr.mxu0 0.0
    %654 = vmatpush2.msra.mxu0 0.0
    %655 = vmatprep.subr.mxu0 0.0
    %656 = vmatpush2.msra.mxu0 0.0
    %657 = vmatprep.mubr.f32.mxu0 0.0
    %658 = vmatmul.mubr.f32.gmra.mxu0 %v591
    %v659 = vpop.f32.mrf.mxu0
    %v660 = vadd.f32 %v589, %v659
    %v661 = vpop.f32.mrf.mxu0
    %v662 = vadd.f32 %v589, %v661
    %663 = vdwg.mxu0
    %664 = vmatprep.subr.mxu0 0.0
    %665 = vmatpush1.msra.mxu0 0.0
    %666 = vmatprep.subr.mxu0 0.0
    %667 = vmatpush1.msra.mxu0 0.0
    %668 = vmatprep.subr.mxu0 0.0
    %669 = vmatpush1.msra.mxu0 0.0
    %670 = vmatprep.subr.mxu0 0.0
    %671 = vmatpush1.msra.mxu0 0.0
    %672 = vmatprep.subr.mxu0 0.0
    %673 = vmatpush1.msra.mxu0 0.0
    %674 = vmatprep.subr.mxu0 0.0
    %675 = vmatpush1.msra.mxu0 0.0
    %676 = vmatprep.subr.mxu0 0.0
    %677 = vmatpush1.msra.mxu0 0.0
    %678 = vmatprep.subr.mxu0 0.0
    %679 = vmatpush1.msra.mxu0 0.0
    %680 = vmatprep.subr.mxu0 0.0
    %681 = vmatpush1.msra.mxu0 0.0
    %682 = vmatprep.subr.mxu0 0.0
    %683 = vmatpush1.msra.mxu0 0.0
    %684 = vmatprep.subr.mxu0 0.0
    %685 = vmatpush1.msra.mxu0 0.0
    %686 = vmatprep.subr.mxu0 0.0
    %687 = vmatpush1.msra.mxu0 0.0
    %688 = vmatprep.subr.mxu0 0.0
    %689 = vmatpush1.msra.mxu0 0.0
    %690 = vmatprep.subr.mxu0 0.0
    %691 = vmatpush1.msra.mxu0 0.0
    %692 = vmatprep.subr.mxu0 0.0
    %693 = vmatpush1.msra.mxu0 %v578
    %694 = vmatprep.subr.mxu0 0.0
    %695 = vmatpush1.msra.mxu0 %v575
    %696 = vmatprep.subr.mxu0 0.0
    %697 = vmatpush2.msra.mxu0 0.0
    %698 = vmatprep.subr.mxu0 0.0
    %699 = vmatpush2.msra.mxu0 0.0
    %700 = vmatprep.subr.mxu0 0.0
    %701 = vmatpush2.msra.mxu0 0.0
    %702 = vmatprep.subr.mxu0 0.0
    %703 = vmatpush2.msra.mxu0 0.0
    %704 = vmatprep.subr.mxu0 0.0
    %705 = vmatpush2.msra.mxu0 0.0
    %706 = vmatprep.subr.mxu0 0.0
    %707 = vmatpush2.msra.mxu0 0.0
    %708 = vmatprep.subr.mxu0 0.0
    %709 = vmatpush2.msra.mxu0 0.0
    %710 = vmatprep.subr.mxu0 0.0
    %711 = vmatpush2.msra.mxu0 0.0
    %712 = vmatprep.subr.mxu0 0.0
    %713 = vmatpush2.msra.mxu0 0.0
    %714 = vmatprep.subr.mxu0 0.0
    %715 = vmatpush2.msra.mxu0 0.0
    %716 = vmatprep.subr.mxu0 0.0
    %717 = vmatpush2.msra.mxu0 0.0
    %718 = vmatprep.subr.mxu0 0.0
    %719 = vmatpush2.msra.mxu0 0.0
    %720 = vmatprep.subr.mxu0 0.0
    %721 = vmatpush2.msra.mxu0 0.0
    %722 = vmatprep.subr.mxu0 0.0
    %723 = vmatpush2.msra.mxu0 0.0
    %724 = vmatprep.subr.mxu0 0.0
    %725 = vmatpush2.msra.mxu0 0.0
    %726 = vmatprep.subr.mxu0 0.0
    %727 = vmatpush2.msra.mxu0 0.0
    %728 = vmatprep.mubr.f32.mxu0 0.0
    %729 = vmatmul.mubr.f32.gmra.mxu0 %v591
    %v730 = vpop.f32.mrf.mxu0
    %v731 = vadd.f32 %v589, %v730
    %v732 = vpop.f32.mrf.mxu0
    %733 = vdwg.mxu0
    %v734 = vmul.f32 %v660, 0.5
    %v735 = vmul.f32 %v662, 0.5
    %v736 = vmul.f32 %v731, 0.5
    %v737 = vtanh.pop %v734
    %v738 = vtanh.pop %v735
    %v739 = vtanh.pop %v736
    %v740 = vadd.f32 %v737, 1.0
    %v741 = vadd.f32 %v738, 1.0
    %v742 = vadd.f32 %v739, 1.0
    %v743 = vmul.f32 %v740, 0.5
    %v744 = vmul.f32 %v741, 0.5
    %v745 = vmul.f32 %v742, 0.5
    %v749 = vcombine.low %v743, %v744
    %v751 = vunpack.c.l.s4 1966171168
    %v752 = vunpack.c.0.s8 %v751
    %v753 = vlaneseq
    %v754 = vshrl.u32 %v753, 7
    %v755 = vsub.s32 %v752, %v754
    %v756 = vrot.slane %v749, %v755
    %v758 = vunpack.c.l.s4 1966171168
    %v759 = vunpack.c.0.s8 %v758
    %v760 = vlaneseq
    %v761 = vshrl.u32 %v760, 7
    %v762 = vsub.s32 %v759, %v761
    %v763 = vrot.slane %v745, %v762
    %v764 = vcombine.low %v756, %v763
    %v766 = vunpack.c.l.s4 1966171168
    %v767 = vunpack.c.0.s8 %v766
    %v768 = vlaneseq
    %v769 = vshrl.u32 %v768, 7
    %v770 = vsub.s32 %v767, %v769
    %v771 = vrot.slane %v764, %v770
    %v773 = vlaneseq
    %vm774 = vcmp.ge.s32.totalorder %v773, 0
    %vm775 = vcmp.lt.s32.totalorder %v773, 384
    %vm776 = vmand %vm774, %vm775
    %777 = vst.msk [vmem:[#allocation3] sm:$0x7] %vm776, %v771
    // Predicated region
    $region30: #{tpu_custom_call.1} parent=1 // pred_check
      _
    $region31: #{tpu_custom_call.1} parent=1 // pred_check_branch
      %779 = sbr.rel (0) target = $region33
    $region32: #{tpu_custom_call.1} parent=1 // pred_region
      %s781 = ssub.s32 48, 48
      %782 = vsyncadd [#allocation4], %s781
      %s784 = sshll.u32 [#allocation3], 4
      %s785 = int_to_ptr.vmem [resolvable:$true] %s784
      %787 = dma.vmem_to_hbm [thread:$0]  %s785, 48, %s7, [#allocation4]
    $region33: #{tpu_custom_call.1} parent=1 // pred_fallthru
      _
    // Predicated region
    $region34: #{tpu_custom_call.1} parent=1 // pred_check
      _
    $region35: #{tpu_custom_call.1} parent=1 // pred_check_branch
      %789 = sbr.rel (0) target = $region37
    $region36: #{tpu_custom_call.1} parent=1 // pred_region
      %790 = dma.done [#allocation4], 48
    $region37: #{tpu_custom_call.1} parent=1 // pred_fallthru
      _
    %791 = vsyncpa [#allocation4], 1

</llo_original>
